<compile_context>
chip_gen: v6e
topology: v6e:2x2x1
jax: 0.10.0
libtpu: 0.0.40
codegen_flags: <defaults>
</compile_context>

<pallas_src>
import functools

import jax
import jax.numpy as jnp
from jax.experimental import pallas as pl
from jax.experimental.pallas import tpu as pltpu

NUM_STATE = 5
NUM_ACTION = 5
HIDDEN = 32
K_PAD = 8        # num_state padded to 8 sublanes; row NUM_STATE carries the fc1 bias
OUT_PAD = 8      # action rows padded 5 -> 8 so the output block is a full (8,128) tile

DEFAULT_BLOCK_B = 8192     # lanes per grid step (sweepable; multiple of 128)
MAX_BLOCK_B = 65536        # VMEM ceiling: ~8 MiB double-buffered, safe on v7x (64 MiB)


def _cdiv(a, b):
    return -(-a // b)


def _round_up(n, m):
    return _cdiv(n, m) * m


def actor_kernel(xT_ref, w1T_ref, w2T_ref, b2_ref, outT_ref):
    # xT_ref:   [K_PAD, B_blk]     batch on lanes; row NUM_STATE == 1.0 (bias carrier)
    # w1T_ref:  [HIDDEN, K_PAD]    column NUM_STATE == fc1 bias
    # w2T_ref:  [OUT_PAD, HIDDEN]  rows >= NUM_ACTION are zero
    # b2_ref:   [OUT_PAD, 1]       rows >= NUM_ACTION are zero
    # outT_ref: [OUT_PAD, B_blk]   rows >= NUM_ACTION are padding (sliced off outside)

    # fc1 (+ bias via the padded K column) + ReLU:
    #   [HIDDEN, K_PAD] @ [K_PAD, B_blk] -> [HIDDEN, B_blk]
    h = jnp.maximum(
        jnp.dot(w1T_ref[...], xT_ref[...], preferred_element_type=jnp.float32),
        0.0)

    # action_head + tanh: [OUT_PAD, HIDDEN] @ [HIDDEN, B_blk] -> [OUT_PAD, B_blk]
    y = jnp.tanh(
        jnp.dot(w2T_ref[...], h, preferred_element_type=jnp.float32)
        + b2_ref[...])

    # Softmax over the action (sublane) axis.  tanh-bounded logits -> no
    # max-subtraction needed.  Padded rows have y == 0 exactly (zero weights,
    # zero bias), so e == 1 there; subtracting the constant recovers the true
    # denominator without any masking ops.
    e = jnp.exp(y)
    denom = jnp.sum(e, axis=0, keepdims=True) - float(OUT_PAD - NUM_ACTION)
    r = pl.reciprocal(denom, approx=True)        # EUP vrcp (free slot)
    r = r * (2.0 - denom * r)                    # one Newton step -> ~f32 exact
    outT_ref[...] = e * r


def _pick_block(b_lane, block_b):
    """Choose a lane-aligned batch block. b_lane is the batch rounded to 128."""
    bblk = max(128, _round_up(min(int(block_b), MAX_BLOCK_B), 128))
    bblk = min(bblk, b_lane)
    # v7x megacore: ensure >= 2 grid steps on the "parallel" batch axis when
    # there is enough work, so both TensorCores get a share.  On v5e/v6e this
    # costs at most one extra ~0.35 us step.
    half = _round_up(_cdiv(b_lane, 2), 128)
    if half >= 512:
        bblk = min(bblk, half)
    return bblk


def _actor_pallas(xT, w1T, w2T, b2c, bblk):
    b_pad = xT.shape[1]
    const = lambda shape: pl.BlockSpec(shape, lambda i: (0, 0))  # resident in VMEM
    return pl.pallas_call(
        actor_kernel,
        out_shape=jax.ShapeDtypeStruct((OUT_PAD, b_pad), jnp.float32),
        grid=(b_pad // bblk,),
        in_specs=[
            pl.BlockSpec((K_PAD, bblk), lambda i: (0, i)),   # streamed batch tiles
            const((HIDDEN, K_PAD)),
            const((OUT_PAD, HIDDEN)),
            const((OUT_PAD, 1)),
        ],
        out_specs=pl.BlockSpec((OUT_PAD, bblk), lambda i: (0, i)),
        compiler_params=pltpu.CompilerParams(
            dimension_semantics=("parallel",)),
    )(xT, w1T, w2T, b2c)


def prepare_params(w1, b1, w2, b2):
    """Pack [in, out]-layout params into the kernel's lane-dense layout."""
    w1 = jnp.asarray(w1, jnp.float32)
    b1 = jnp.asarray(b1, jnp.float32).reshape(HIDDEN)
    w2 = jnp.asarray(w2, jnp.float32)
    b2 = jnp.asarray(b2, jnp.float32).reshape(NUM_ACTION)

    w1T = jnp.zeros((HIDDEN, K_PAD), jnp.float32)
    w1T = w1T.at[:, :NUM_STATE].set(w1.T)
    w1T = w1T.at[:, NUM_STATE].set(b1)               # bias folded into padded K column

    w2T = jnp.zeros((OUT_PAD, HIDDEN), jnp.float32)
    w2T = w2T.at[:NUM_ACTION, :].set(w2.T)           # padded rows stay exactly zero

    b2c = jnp.zeros((OUT_PAD, 1), jnp.float32)
    b2c = b2c.at[:NUM_ACTION, 0].set(b2)
    return w1T, w2T, b2c


@functools.partial(jax.jit, static_argnames=("block_b",))
def actor_forward_fm(xT, w1T, w2T, b2c, *, block_b=DEFAULT_BLOCK_B):
    """Feature-major (production) path: xT is [num_state, B]; returns
    [num_action, B].  Avoids the batch-major transpose passes around the
    memory-bound kernel."""
    B = xT.shape[1]
    b_lane = _round_up(B, 128)
    bblk = _pick_block(b_lane, block_b)
    b_pad = _round_up(b_lane, bblk)

    xTp = jnp.zeros((K_PAD, b_pad), jnp.float32)
    xTp = xTp.at[:NUM_STATE, :B].set(xT.astype(jnp.float32))
    xTp = xTp.at[NUM_STATE, :].set(1.0)              # bias row rides the MXU contraction

    outT = _actor_pallas(xTp, w1T, w2T, b2c, bblk)
    return outT[:NUM_ACTION, :B]


@functools.partial(jax.jit, static_argnames=("block_b",))
def actor_forward(x, w1, b1, w2, b2, *, block_b=DEFAULT_BLOCK_B):
    """Drop-in equivalent of Actor.forward: x [B, num_state] -> [B, num_action].
    The transpose to/from the lane-dense layout is layout plumbing around the
    kernel; callers that can stay feature-major should use actor_forward_fm.
    Optional (production): stream x / out in bf16 to halve HBM bytes, keeping
    f32 accumulation in-kernel (exceeds the 2e-5 test tolerance, so not done
    here)."""
    w1T, w2T, b2c = prepare_params(w1, b1, w2, b2)
    B = x.shape[0]
    b_lane = _round_up(B, 128)
    bblk = _pick_block(b_lane, block_b)
    b_pad = _round_up(b_lane, bblk)

    xT = jnp.zeros((K_PAD, b_pad), jnp.float32)
    xT = xT.at[:NUM_STATE, :B].set(x.T.astype(jnp.float32))
    xT = xT.at[NUM_STATE, :].set(1.0)                # bias row

    outT = _actor_pallas(xT, w1T, w2T, b2c, bblk)
    return outT[:NUM_ACTION, :B].T                   # back to [B, num_action]


def init_params(key):
    # Deterministic synthetic init (PyTorch-Linear-like uniform ranges),
    # stored as [in_features, out_features] so forward is x @ W + b.
    k1, k2, k3, k4 = jax.random.split(key, 4)
    bound1 = 1.0 / jnp.sqrt(NUM_STATE)
    bound2 = 1.0 / jnp.sqrt(HIDDEN)
    w1 = jax.random.uniform(k1, (NUM_STATE, HIDDEN), jnp.float32, -bound1, bound1)
    b1 = jax.random.uniform(k2, (1, HIDDEN), jnp.float32, -bound1, bound1)
    w2 = jax.random.uniform(k3, (HIDDEN, NUM_ACTION), jnp.float32, -bound2, bound2)
    b2 = jax.random.uniform(k4, (1, NUM_ACTION), jnp.float32, -bound2, bound2)
    return w1, b1, w2, b2


def reference_forward(x, w1, b1, w2, b2):
    h = jnp.maximum(x @ w1 + b1, 0.0)
    y = jnp.tanh(h @ w2 + b2)
    return jax.nn.softmax(y, axis=1)


if __name__ == "__main__":
    key = jax.random.PRNGKey(0)
    kx, kp = jax.random.split(key)
    w1, b1, w2, b2 = init_params(kp)

    # (B, block_b) cases:
    #   B=8    : single block, heavy tail padding.
    #   B=260  : block_b=128 -> 3-step batch grid (multi-block path).
    #   B=1000 : odd block_b (rounded to 128 internally) + default-policy cap
    #            that splits the parallel axis into >=2 steps (v7x 2-TC path).
    for B, blk in ((8, 128), (260, 128), (1000, DEFAULT_BLOCK_B)):
        x = jax.random.normal(jax.random.fold_in(kx, B), (B, NUM_STATE),
                              dtype=jnp.float32)
        out = jax.block_until_ready(actor_forward(x, w1, b1, w2, b2, block_b=blk))
        ref = reference_forward(x, w1, b1, w2, b2)
        assert out.shape == (B, NUM_ACTION)
        assert jnp.allclose(out, ref, atol=2e-5, rtol=2e-5), "mismatch vs reference"
        assert jnp.allclose(jnp.sum(out, axis=1), 1.0, atol=2e-5), "rows must sum to 1"

        # Feature-major path must agree too.
        w1T, w2T, b2c = prepare_params(w1, b1, w2, b2)
        out_fm = jax.block_until_ready(
            actor_forward_fm(x.T, w1T, w2T, b2c, block_b=blk))
        assert jnp.allclose(out_fm.T, ref, atol=2e-5, rtol=2e-5), "fm path mismatch"

    print("KERNEL_OK")
</pallas_src>

<mosaic_0001>
module attributes {stable_mosaic.version = 11 : i64} {
  func.func @actor_kernel(%arg0: i32, %arg1: memref<8x128xf32, #tpu.memory_space<vmem>>, %arg2: memref<32x8xf32, #tpu.memory_space<vmem>>, %arg3: memref<8x32xf32, #tpu.memory_space<vmem>>, %arg4: memref<8x1xf32, #tpu.memory_space<vmem>>, %arg5: memref<8x128xf32, #tpu.memory_space<vmem>>) attributes {dimension_semantics = [#tpu.dimension_semantics<parallel>], iteration_bounds = array<i64: 1>, scalar_prefetch = 0 : i64, scratch_operands = 0 : i64, tpu.core_type = #tpu.core_type<tc>, window_params = [{transform_indices = @transform_0, window_bounds = array<i64: 8, 128>}, {pipeline_mode = #tpu.pipeline_mode<synchronous>, transform_indices = @transform_1, window_bounds = array<i64: 32, 8>}, {pipeline_mode = #tpu.pipeline_mode<synchronous>, transform_indices = @transform_2, window_bounds = array<i64: 8, 32>}, {pipeline_mode = #tpu.pipeline_mode<synchronous>, transform_indices = @transform_3, window_bounds = array<i64: 8, 1>}, {transform_indices = @transform_4, window_bounds = array<i64: 8, 128>}]} {
    %c0 = arith.constant 0 : index
    %c0_0 = arith.constant 0 : index
    %0 = vector.load %arg2[%c0, %c0_0] : memref<32x8xf32, #tpu.memory_space<vmem>>, vector<32x8xf32>
    %c0_1 = arith.constant 0 : index
    %c0_2 = arith.constant 0 : index
    %1 = vector.load %arg1[%c0_1, %c0_2] : memref<8x128xf32, #tpu.memory_space<vmem>>, vector<8x128xf32>
    %cst = arith.constant dense<0.000000e+00> : vector<32x128xf32>
    %2 = tpu.matmul %0, %1, %cst {dimension_numbers = #tpu.dot_dimension_numbers<[1], [0], [0], [1], [0, 0, 1, 1], [], []>} : vector<32x8xf32>, vector<8x128xf32>, vector<32x128xf32> -> vector<32x128xf32>
    %cst_3 = arith.constant 0.000000e+00 : f32
    %3 = vector.broadcast %cst_3 : f32 to vector<32x128xf32>
    %4 = arith.maximumf %2, %3 : vector<32x128xf32>
    %c0_4 = arith.constant 0 : index
    %c0_5 = arith.constant 0 : index
    %5 = vector.load %arg3[%c0_4, %c0_5] : memref<8x32xf32, #tpu.memory_space<vmem>>, vector<8x32xf32>
    %cst_6 = arith.constant dense<0.000000e+00> : vector<8x128xf32>
    %6 = tpu.matmul %5, %4, %cst_6 {dimension_numbers = #tpu.dot_dimension_numbers<[1], [0], [0], [1], [0, 0, 1, 1], [], []>} : vector<8x32xf32>, vector<32x128xf32>, vector<8x128xf32> -> vector<8x128xf32>
    %c0_7 = arith.constant 0 : index
    %c0_8 = arith.constant 0 : index
    %7 = vector.load %arg4[%c0_7, %c0_8] : memref<8x1xf32, #tpu.memory_space<vmem>>, vector<8x1xf32>
    %8 = vector.broadcast %7 : vector<8x1xf32> to vector<8x128xf32>
    %9 = arith.addf %6, %8 : vector<8x128xf32>
    %10 = math.tanh %9 : vector<8x128xf32>
    %11 = math.exp %10 : vector<8x128xf32>
    %cst_9 = arith.constant dense<0.000000e+00> : vector<128xf32>
    %12 = vector.multi_reduction <add>, %11, %cst_9 [0] : vector<8x128xf32> to vector<128xf32>
    %13 = vector.shape_cast %12 : vector<128xf32> to vector<1x128xf32>
    %cst_10 = arith.constant 3.000000e+00 : f32
    %14 = vector.broadcast %cst_10 : f32 to vector<1x128xf32>
    %15 = arith.subf %13, %14 : vector<1x128xf32>
    %16 = tpu.reciprocal %15 {approx = true} : vector<1x128xf32> -> vector<1x128xf32>
    %17 = arith.mulf %15, %16 : vector<1x128xf32>
    %cst_11 = arith.constant 2.000000e+00 : f32
    %18 = vector.broadcast %cst_11 : f32 to vector<1x128xf32>
    %19 = arith.subf %18, %17 : vector<1x128xf32>
    %20 = arith.mulf %16, %19 : vector<1x128xf32>
    %21 = vector.broadcast %20 : vector<1x128xf32> to vector<8x128xf32>
    %22 = arith.mulf %11, %21 : vector<8x128xf32>
    %c0_12 = arith.constant 0 : index
    %c0_13 = arith.constant 0 : index
    %23 = vector.load %arg5[%c0_12, %c0_13] : memref<8x128xf32, #tpu.memory_space<vmem>>, vector<8x128xf32>
    tpu.vector_store %arg5[%c0_12, %c0_13], %22 {strides = array<i32>} : memref<8x128xf32, #tpu.memory_space<vmem>>, vector<8x128xf32>,
    return
  }
  func.func @transform_0(%arg0: i32) -> (i32, i32) {
    %c0_i32 = arith.constant 0 : i32
    %c0_i32_0 = arith.constant 0 : i32
    return %c0_i32, %arg0 : i32, i32
  }
  func.func @transform_1(%arg0: i32) -> (i32, i32) {
    %c0_i32 = arith.constant 0 : i32
    %c0_i32_0 = arith.constant 0 : i32
    %c0_i32_1 = arith.constant 0 : i32
    return %c0_i32, %c0_i32_0 : i32, i32
  }
  func.func @transform_2(%arg0: i32) -> (i32, i32) {
    %c0_i32 = arith.constant 0 : i32
    %c0_i32_0 = arith.constant 0 : i32
    %c0_i32_1 = arith.constant 0 : i32
    return %c0_i32, %c0_i32_0 : i32, i32
  }
  func.func @transform_3(%arg0: i32) -> (i32, i32) {
    %c0_i32 = arith.constant 0 : i32
    %c0_i32_0 = arith.constant 0 : i32
    %c0_i32_1 = arith.constant 0 : i32
    return %c0_i32, %c0_i32_0 : i32, i32
  }
  func.func @transform_4(%arg0: i32) -> (i32, i32) {
    %c0_i32 = arith.constant 0 : i32
    %c0_i32_0 = arith.constant 0 : i32
    return %c0_i32, %arg0 : i32, i32
  }
}

</mosaic_0001>

<llo_original>
// kernel: actor_forward.1
$region0: #{actor_forward.1}
  #allocation0 [shape = 'u32[]', space=smem, size = 0x4, offset = 0x4, fixed_abs, tag = 'smem constant byte address 0x4 - core index']
  #allocation1 [shape = 'u32[144,128]{1,0:T(1,128)}', space=vmem, size = 0x12000, scoped, tag = 'internal scratch']
  %s0 = inlined_call_operand.vmem [shape: f32[8,128], index: 0, kind: input, shape index: {}]
  %s1 = inlined_call_operand.vmem [shape: f32[32,8], index: 1, kind: input, shape index: {}]
  %s2 = inlined_call_operand.vmem [shape: f32[8,32], index: 2, kind: input, shape index: {}]
  %s3 = inlined_call_operand.vmem [shape: f32[8,1], index: 3, kind: input, shape index: {}]
  %s4 = inlined_call_operand.vmem [shape: f32[8,128], index: 4, kind: output, shape index: {}]
  %s5 = sld [smem:[#allocation0]]
  $region26: #{actor_forward.1} parent=0
    _
  %s7 = ssub.s32 1, %s5
  %s8 = scalar_select 0, %s7, %s5
  // Predicated region
  $region2: #{actor_forward.1} parent=0 // pred_check
    _
  $region3: #{actor_forward.1} parent=0 // pred_check_branch
    %10 = sbr.rel (0) target = $region5
  $region4: #{actor_forward.1} parent=0 // pred_region
    _
  $region5: #{actor_forward.1} parent=0 // pred_fallthru
    _
  // Predicated region
  $region6: #{actor_forward.1} parent=0 // pred_check
    _
  $region7: #{actor_forward.1} parent=0 // pred_check_branch
    %12 = sbr.rel (0) target = $region9
  $region8: #{actor_forward.1} parent=0 // pred_region
    _
  $region9: #{actor_forward.1} parent=0 // pred_fallthru
    _
  // Predicated region
  $region10: #{actor_forward.1} parent=0 // pred_check
    _
  $region11: #{actor_forward.1} parent=0 // pred_check_branch
    %14 = sbr.rel (0) target = $region13
  $region12: #{actor_forward.1} parent=0 // pred_region
    _
  $region13: #{actor_forward.1} parent=0 // pred_fallthru
    _
  // Predicated region
  $region14: #{actor_forward.1} parent=0 // pred_check
    _
  $region15: #{actor_forward.1} parent=0 // pred_check_branch
    %16 = sbr.rel (0) target = $region17
  $region16: #{actor_forward.1} parent=0 // pred_region
    _
  $region17: #{actor_forward.1} parent=0 // pred_fallthru
    _
  %v17 = vld [vmem:[%s1] sm:$0xff]
  %v18 = vld [vmem:[%s1 + $0x8] sm:$0xff]
  %v19 = vld [vmem:[%s1 + $0x10] sm:$0xff]
  %v20 = vld [vmem:[%s1 + $0x18] sm:$0xff]
  %v21 = vld [vmem:[%s0] sm:$0xff]
  %vm22 = vcmask 64512
  %v24 = vsel %vm22, %v17, 0
  %v27 = vsel %vm22, %v18, 0
  %v30 = vsel %vm22, %v19, 0
  %v33 = vsel %vm22, %v20, 0
  %35 = vmatprep.subr.mxu0 0.0
  %36 = vmatpush1.msra.mxu0 0.0
  %37 = vmatprep.subr.mxu0 0.0
  %38 = vmatpush1.msra.mxu0 0.0
  %39 = vmatprep.subr.mxu0 0.0
  %40 = vmatpush1.msra.mxu0 0.0
  %41 = vmatprep.subr.mxu0 0.0
  %42 = vmatpush1.msra.mxu0 0.0
  %43 = vmatprep.subr.mxu0 0.0
  %44 = vmatpush1.msra.mxu0 0.0
  %45 = vmatprep.subr.mxu0 0.0
  %46 = vmatpush1.msra.mxu0 0.0
  %47 = vmatprep.subr.mxu0 0.0
  %48 = vmatpush1.msra.mxu0 0.0
  %49 = vmatprep.subr.mxu0 0.0
  %50 = vmatpush1.msra.mxu0 0.0
  %51 = vmatprep.subr.mxu0 0.0
  %52 = vmatpush1.msra.mxu0 0.0
  %53 = vmatprep.subr.mxu0 0.0
  %54 = vmatpush1.msra.mxu0 0.0
  %55 = vmatprep.subr.mxu0 0.0
  %56 = vmatpush1.msra.mxu0 0.0
  %57 = vmatprep.subr.mxu0 0.0
  %58 = vmatpush1.msra.mxu0 0.0
  %59 = vmatprep.subr.mxu0 0.0
  %60 = vmatpush1.msra.mxu0 0.0
  %61 = vmatprep.subr.mxu0 0.0
  %62 = vmatpush1.msra.mxu0 0.0
  %63 = vmatprep.subr.mxu0 0.0
  %64 = vmatpush1.msra.mxu0 0.0
  %65 = vmatprep.subr.mxu0 0.0
  %66 = vmatpush1.msra.mxu0 %v21
  %67 = vmatprep.subr.mxu0 0.0
  %68 = vmatpush2.msra.mxu0 0.0
  %69 = vmatprep.subr.mxu0 0.0
  %70 = vmatpush2.msra.mxu0 0.0
  %71 = vmatprep.subr.mxu0 0.0
  %72 = vmatpush2.msra.mxu0 0.0
  %73 = vmatprep.subr.mxu0 0.0
  %74 = vmatpush2.msra.mxu0 0.0
  %75 = vmatprep.subr.mxu0 0.0
  %76 = vmatpush2.msra.mxu0 0.0
  %77 = vmatprep.subr.mxu0 0.0
  %78 = vmatpush2.msra.mxu0 0.0
  %79 = vmatprep.subr.mxu0 0.0
  %80 = vmatpush2.msra.mxu0 0.0
  %81 = vmatprep.subr.mxu0 0.0
  %82 = vmatpush2.msra.mxu0 0.0
  %83 = vmatprep.subr.mxu0 0.0
  %84 = vmatpush2.msra.mxu0 0.0
  %85 = vmatprep.subr.mxu0 0.0
  %86 = vmatpush2.msra.mxu0 0.0
  %87 = vmatprep.subr.mxu0 0.0
  %88 = vmatpush2.msra.mxu0 0.0
  %89 = vmatprep.subr.mxu0 0.0
  %90 = vmatpush2.msra.mxu0 0.0
  %91 = vmatprep.subr.mxu0 0.0
  %92 = vmatpush2.msra.mxu0 0.0
  %93 = vmatprep.subr.mxu0 0.0
  %94 = vmatpush2.msra.mxu0 0.0
  %95 = vmatprep.subr.mxu0 0.0
  %96 = vmatpush2.msra.mxu0 0.0
  %97 = vmatprep.subr.mxu0 0.0
  %98 = vmatpush2.msra.mxu0 0.0
  %99 = vmatprep.mubr.f32.mxu0 0.0
  %100 = vmatmul.mubr.f32.gmra.mxu0 %v24
  %v101 = vpop.f32.mrf.mxu0
  %v102 = vadd.f32 0.0, %v101
  %v103 = vpop.f32.mrf.mxu0
  %104 = vmatprep.mubr.f32.mxu0 0.0
  %105 = vmatmul.mubr.f32.gmra.mxu0 %v27
  %v106 = vpop.f32.mrf.mxu0
  %v107 = vadd.f32 0.0, %v106
  %v108 = vpop.f32.mrf.mxu0
  %109 = vmatprep.mubr.f32.mxu0 0.0
  %110 = vmatmul.mubr.f32.gmra.mxu0 %v30
  %v111 = vpop.f32.mrf.mxu0
  %v112 = vadd.f32 0.0, %v111
  %v113 = vpop.f32.mrf.mxu0
  %114 = vmatprep.mubr.f32.mxu0 0.0
  %115 = vmatmul.mubr.f32.gmra.mxu0 %v33
  %v116 = vpop.f32.mrf.mxu0
  %v117 = vadd.f32 0.0, %v116
  %v118 = vpop.f32.mrf.mxu0
  %119 = vdwg.mxu0
  %v120 = vmax.f32 %v102, 0.0
  %v121 = vmax.f32 %v107, 0.0
  %v122 = vmax.f32 %v112, 0.0
  %v123 = vmax.f32 %v117, 0.0
  %v124 = vld [vmem:[%s2] sm:$0xff]
  %v125 = vld [vmem:[%s3] sm:$0xff]
  %127 = vset.pattern.permute.xlu0 0
  %128 = vperm.xlu0 %127, %v125
  %v129 = vpop.permute.xlu0 %128
  %vm131 = vcmask 261120
  %v133 = vsel %vm131, %v124, 0
  %135 = vmatprep.subr.mxu0 0.0
  %136 = vmatpush1.msra.mxu0 0.0
  %137 = vmatprep.subr.mxu0 0.0
  %138 = vmatpush1.msra.mxu0 0.0
  %139 = vmatprep.subr.mxu0 0.0
  %140 = vmatpush1.msra.mxu0 0.0
  %141 = vmatprep.subr.mxu0 0.0
  %142 = vmatpush1.msra.mxu0 0.0
  %143 = vmatprep.subr.mxu0 0.0
  %144 = vmatpush1.msra.mxu0 0.0
  %145 = vmatprep.subr.mxu0 0.0
  %146 = vmatpush1.msra.mxu0 0.0
  %147 = vmatprep.subr.mxu0 0.0
  %148 = vmatpush1.msra.mxu0 0.0
  %149 = vmatprep.subr.mxu0 0.0
  %150 = vmatpush1.msra.mxu0 0.0
  %151 = vmatprep.subr.mxu0 0.0
  %152 = vmatpush1.msra.mxu0 0.0
  %153 = vmatprep.subr.mxu0 0.0
  %154 = vmatpush1.msra.mxu0 0.0
  %155 = vmatprep.subr.mxu0 0.0
  %156 = vmatpush1.msra.mxu0 0.0
  %157 = vmatprep.subr.mxu0 0.0
  %158 = vmatpush1.msra.mxu0 0.0
  %159 = vmatprep.subr.mxu0 0.0
  %160 = vmatpush1.msra.mxu0 %v123
  %161 = vmatprep.subr.mxu0 0.0
  %162 = vmatpush1.msra.mxu0 %v122
  %163 = vmatprep.subr.mxu0 0.0
  %164 = vmatpush1.msra.mxu0 %v121
  %165 = vmatprep.subr.mxu0 0.0
  %166 = vmatpush1.msra.mxu0 %v120
  %167 = vmatprep.subr.mxu0 0.0
  %168 = vmatpush2.msra.mxu0 0.0
  %169 = vmatprep.subr.mxu0 0.0
  %170 = vmatpush2.msra.mxu0 0.0
  %171 = vmatprep.subr.mxu0 0.0
  %172 = vmatpush2.msra.mxu0 0.0
  %173 = vmatprep.subr.mxu0 0.0
  %174 = vmatpush2.msra.mxu0 0.0
  %175 = vmatprep.subr.mxu0 0.0
  %176 = vmatpush2.msra.mxu0 0.0
  %177 = vmatprep.subr.mxu0 0.0
  %178 = vmatpush2.msra.mxu0 0.0
  %179 = vmatprep.subr.mxu0 0.0
  %180 = vmatpush2.msra.mxu0 0.0
  %181 = vmatprep.subr.mxu0 0.0
  %182 = vmatpush2.msra.mxu0 0.0
  %183 = vmatprep.subr.mxu0 0.0
  %184 = vmatpush2.msra.mxu0 0.0
  %185 = vmatprep.subr.mxu0 0.0
  %186 = vmatpush2.msra.mxu0 0.0
  %187 = vmatprep.subr.mxu0 0.0
  %188 = vmatpush2.msra.mxu0 0.0
  %189 = vmatprep.subr.mxu0 0.0
  %190 = vmatpush2.msra.mxu0 0.0
  %191 = vmatprep.subr.mxu0 0.0
  %192 = vmatpush2.msra.mxu0 0.0
  %193 = vmatprep.subr.mxu0 0.0
  %194 = vmatpush2.msra.mxu0 0.0
  %195 = vmatprep.subr.mxu0 0.0
  %196 = vmatpush2.msra.mxu0 0.0
  %197 = vmatprep.subr.mxu0 0.0
  %198 = vmatpush2.msra.mxu0 0.0
  %199 = vmatprep.mubr.f32.mxu0 0.0
  %200 = vmatmul.mubr.f32.gmra.mxu0 %v133
  %v201 = vpop.f32.mrf.mxu0
  %v202 = vadd.f32 %v129, %v201
  %v203 = vpop.f32.mrf.mxu0
  %204 = vdwg.mxu0
  %v205 = vtanh.pop %v202
  %v206 = vmul.f32 %v205, 1.442695
  %v207 = vpow.pop %v206
  %v208 = vrot.slane %v207, 4
  %v209 = vadd.f32 %v207, %v208
  %v210 = vrot.slane %v209, 2
  %v211 = vadd.f32 %v209, %v210
  %v212 = vrot.slane %v211, 1
  %v213 = vadd.f32 %v211, %v212
  %v214 = vsub.f32 %v213, 3.0
  %v215 = vrcp.pop %v214
  %v216 = vmul.f32 %v214, %v215
  %v217 = vsub.f32 2.0, %v216
  %v218 = vmul.f32 %v215, %v217
  %v219 = vmul.f32 %v207, %v218
  %220 = vst [vmem:[%s4] sm:$0xff] %v219
  // Predicated region
  $region18: #{actor_forward.1} parent=0 // pred_check
    _
  $region19: #{actor_forward.1} parent=0 // pred_check_branch
    %222 = sbr.rel (0) target = $region21
  $region20: #{actor_forward.1} parent=0 // pred_region
    _
  $region21: #{actor_forward.1} parent=0 // pred_fallthru
    _
  // Predicated region
  $region22: #{actor_forward.1} parent=0 // pred_check
    _
  $region23: #{actor_forward.1} parent=0 // pred_check_branch
    %224 = sbr.rel (0) target = $region25
  $region24: #{actor_forward.1} parent=0 // pred_region
    _
  $region25: #{actor_forward.1} parent=0 // pred_fallthru
    _

</llo_original>
